<compile_context>
chip_gen: v5e
topology: v5e:2x2
jax: 0.10.0
libtpu: 0.0.40
codegen_flags: <defaults>
</compile_context>

<pallas_src>
import functools

import jax
import jax.numpy as jnp
from jax import lax
from jax.experimental import pallas as pl
from jax.experimental.pallas import tpu as pltpu


def _udconex_kernel(posconf_ref, neg_ref, out_ref, acc_ref, *,
                    batch, num_neg, tb, tn, slab):
    """Grid step (i, j): row tile i ("parallel"), col tile j (reduction).

    posconf_ref : (2, B)       resident; row 0 = pos_score, row 1 = confidence
    neg_ref     : (tb, tn)     streamed tile of neg_score (native dtype)
    out_ref     : (1, 1, 128)  per-row-tile partial loss (lane 0), f32
    acc_ref     : (slab, tn)   f32 VMEM accumulator (per-lane partial sums)
    """
    i = pl.program_id(0)
    j = pl.program_id(1)
    last_j = pl.num_programs(1) - 1

    @pl.when(j == 0)
    def _init():
        acc_ref[...] = jnp.zeros_like(acc_ref)

    n_slabs = tb // slab

    def fold(masked):
        if masked:
            col_ok = (j * tn + lax.broadcasted_iota(jnp.int32, (1, tn), 1)) < num_neg

        def body(k, carry):
            r0 = pl.multiple_of(k * slab, slab)
            x = jnp.clip(neg_ref[pl.ds(r0, slab), :].astype(jnp.float32), 0.0, 1.0)
            if masked:
                row_ok = (i * tb + r0 +
                          lax.broadcasted_iota(jnp.int32, (slab, 1), 0)) < batch
                x = jnp.where(jnp.logical_and(row_ok, col_ok), x, 0.0)
            acc_ref[...] += x * x            # VPU-only fold, no XLU per step
            return carry

        lax.fori_loop(0, n_slabs, body, 0, unroll=True)

    # Masked path exists only if a partial edge tile can exist (static check),
    # and runs only on that edge tile (dynamic check).
    conds = []
    if batch % tb != 0:
        conds.append(i == pl.num_programs(0) - 1)
    if num_neg % tn != 0:
        conds.append(j == last_j)

    if not conds:
        fold(False)
    else:
        need_mask = conds[0]
        for c in conds[1:]:
            need_mask = jnp.logical_or(need_mask, c)

        @pl.when(need_mask)
        def _edge():
            fold(True)

        @pl.when(jnp.logical_not(need_mask))
        def _interior():
            fold(False)

    @pl.when(j == last_j)
    def _finalize():
        # One cross-lane reduce per row tile; divide by the ORIGINAL N.
        partial = jnp.sum(acc_ref[...]) / float(num_neg)
        # Tiny positive-sample term: clamp scores only, never the confidence.
        p = jnp.clip(posconf_ref[0:1, :].astype(jnp.float32), 0.0, 1.0)
        c = posconf_ref[1:2, :].astype(jnp.float32)
        d = p - c
        pos_loss = jnp.sum(d * d)
        total = partial + jnp.where(i == 0, pos_loss, 0.0)   # added exactly once
        lane = lax.broadcasted_iota(jnp.int32, (1, 1, 128), 2)
        out_ref[...] = jnp.where(lane == 0, total, 0.0)


def udconex_loss(pos_score, neg_score, pos_sample, *,
                 target_tile_bytes=4 * 1024 * 1024,
                 max_col_tile=8192):
    """pos_score: (B,), neg_score: (B, N), pos_sample: (B, >=4) (col 3 = confidence)."""
    (B,) = pos_score.shape
    Bn, N = neg_score.shape
    assert Bn == B, "pos_score and neg_score batch mismatch"

    # Pack pos_score + confidence into one tiny resident (2, B) block (one DMA).
    pc_dtype = jnp.promote_types(pos_score.dtype, pos_sample.dtype)
    posconf = jnp.stack(
        [pos_score.astype(pc_dtype), pos_sample[:, 3].astype(pc_dtype)], axis=0)

    itemsize = jnp.dtype(neg_score.dtype).itemsize

    # Column tiling: untiled if N is modest (block last dim == full dim is always
    # legal), else 128-aligned tiles with a masked tail.
    if N <= max_col_tile:
        tn = N
    else:
        tn = max((max_col_tile // 128) * 128, 128)
    n_col_tiles = pl.cdiv(N, tn)

    # Row tiling: 8-aligned tiles sized for ~target_tile_bytes (Pallas
    # double-buffers them), masked tail if B is not a multiple of the tile.
    # (On v5e, raising target_tile_bytes to 8-16 MiB shaves per-step overhead.)
    if B <= 8:
        tb = B
        slab = B
    else:
        bytes_per_row = max(tn, 128) * itemsize
        rows = max(8, (target_tile_bytes // bytes_per_row) // 8 * 8)
        tb = int(min(rows, (B // 8) * 8))
        slab = 8
    n_row_tiles = pl.cdiv(B, tb)

    kernel = functools.partial(_udconex_kernel, batch=B, num_neg=N,
                               tb=tb, tn=tn, slab=slab)

    out = pl.pallas_call(
        kernel,
        out_shape=jax.ShapeDtypeStruct((n_row_tiles, 1, 128), jnp.float32),
        grid=(n_row_tiles, n_col_tiles),
        in_specs=[
            pl.BlockSpec((2, B), lambda i, j: (0, 0)),     # resident across the grid
            pl.BlockSpec((tb, tn), lambda i, j: (i, j)),   # streamed tiles, native dtype
        ],
        out_specs=pl.BlockSpec((1, 1, 128), lambda i, j: (i, 0, 0)),
        scratch_shapes=[pltpu.VMEM((slab, tn), jnp.float32)],
        compiler_params=pltpu.CompilerParams(
            dimension_semantics=("parallel", "arbitrary"),
            vmem_limit_bytes=32 * 1024 * 1024,
        ),
        cost_estimate=pl.CostEstimate(
            flops=4 * B * N + 3 * B,
            transcendentals=0,
            bytes_accessed=(B * N * itemsize
                            + 2 * B * jnp.dtype(pc_dtype).itemsize
                            + int(n_row_tiles) * 128 * 4),
        ),
    )(posconf, neg_score)

    # Tiny combine of the per-row-tile partials (keeps the parallel row axis
    # race-free across TensorCores on v7x).
    return jnp.sum(out)


def udconex_loss_ref(pos_score, neg_score, pos_sample):
    confidence = pos_sample[:, 3]
    p = jnp.clip(pos_score, 0.0, 1.0)
    n = jnp.clip(neg_score, 0.0, 1.0)
    loss_pos = jnp.sum((p - confidence) ** 2)
    loss_neg = jnp.sum(n ** 2)
    return loss_pos + loss_neg / neg_score.shape[1]


if __name__ == "__main__":
    key = jax.random.PRNGKey(0)
    # (B, N, max_col_tile).  The small col-tile cap in case 2 forces the
    # multi-tile grid and both masked-tail paths at small shapes.
    cases = [
        (8, 128, 8192),   # aligned shapes, 1x1 grid
        (13, 200, 128),   # row tail (tb=8, B=13) + col tiling with col tail (tn=128, N=200)
        (4, 96, 8192),    # B < 8 and N < 128: full-dim blocks
    ]
    for idx, (B, N, mct) in enumerate(cases):
        k1, k2, k3 = jax.random.split(jax.random.fold_in(key, idx), 3)
        # scores fall slightly outside [0, 1] so the clamp is exercised
        pos_score = jax.random.uniform(k1, (B,), jnp.float32, -0.2, 1.2)
        neg_score = jax.random.uniform(k2, (B, N), jnp.float32, -0.2, 1.2)
        # pos_sample: (h, r, t, confidence); only column 3 matters for the loss
        pos_sample = jax.random.uniform(k3, (B, 4), jnp.float32, 0.0, 1.0)

        loss = jax.block_until_ready(
            udconex_loss(pos_score, neg_score, pos_sample, max_col_tile=mct))
        ref = udconex_loss_ref(pos_score, neg_score, pos_sample)
        assert jnp.allclose(loss, ref, rtol=1e-5, atol=1e-5), (idx, loss, ref)

    print("KERNEL_OK")
</pallas_src>

<mosaic_0001>
module attributes {stable_mosaic.version = 11 : i64} {
  func.func @_udconex_kernel(%arg0: i32, %arg1: i32, %arg2: memref<2x8xf32, #tpu.memory_space<vmem>>, %arg3: memref<8x128xf32, #tpu.memory_space<vmem>>, %arg4: memref<1x1x128xf32, #tpu.memory_space<vmem>>, %arg5: memref<8x128xf32, #tpu.memory_space<vmem>>) attributes {dimension_semantics = [#tpu.dimension_semantics<parallel>, #tpu.dimension_semantics<arbitrary>], iteration_bounds = array<i64: 1, 1>, scalar_prefetch = 0 : i64, scratch_operands = 1 : i64, tpu.core_type = #tpu.core_type<tc>, window_params = [{pipeline_mode = #tpu.pipeline_mode<synchronous>, transform_indices = @transform_0, window_bounds = array<i64: 2, 8>}, {transform_indices = @transform_1, window_bounds = array<i64: 8, 128>}, {transform_indices = @transform_2, window_bounds = array<i64: 1, 1, 128>}]} {
    %c0_i32 = arith.constant 0 : i32
    %0 = arith.cmpi eq, %arg1, %c0_i32 : i32
    %1 = arith.extui %0 : i1 to i32
    %c0_i32_0 = arith.constant 0 : i32
    %2 = arith.cmpi ne, %1, %c0_i32_0 : i32
    scf.if %2 {
      %cst_9 = arith.constant 0.000000e+00 : f32
      %18 = vector.broadcast %cst_9 : f32 to vector<8x128xf32>
      %c0_10 = arith.constant 0 : index
      %c0_11 = arith.constant 0 : index
      %19 = vector.load %arg5[%c0_10, %c0_11] : memref<8x128xf32, #tpu.memory_space<vmem>>, vector<8x128xf32>
      tpu.vector_store %arg5[%c0_10, %c0_11], %18 {strides = array<i32>} : memref<8x128xf32, #tpu.memory_space<vmem>>, vector<8x128xf32>,
    } else {
    }
    %c0_i32_1 = arith.constant 0 : i32
    %c8_i32 = arith.constant 8 : i32
    %3 = arith.muli %c0_i32_1, %c8_i32 : i32
    %4 = tpu.assume_multiple %3, 8 : i32
    %5 = arith.index_cast %4 : i32 to index
    %c0 = arith.constant 0 : index
    %6 = vector.load %arg3[%5, %c0] : memref<8x128xf32, #tpu.memory_space<vmem>>, vector<8x128xf32>
    %cst = arith.constant 0.000000e+00 : f32
    %cst_2 = arith.constant 1.000000e+00 : f32
    %7 = vector.broadcast %cst : f32 to vector<8x128xf32>
    %8 = arith.maximumf %7, %6 : vector<8x128xf32>
    %9 = vector.broadcast %cst_2 : f32 to vector<8x128xf32>
    %10 = arith.minimumf %9, %8 : vector<8x128xf32>
    %c0_3 = arith.constant 0 : index
    %c0_4 = arith.constant 0 : index
    %11 = vector.load %arg5[%c0_3, %c0_4] : memref<8x128xf32, #tpu.memory_space<vmem>>, vector<8x128xf32>
    %12 = arith.mulf %10, %10 : vector<8x128xf32>
    %13 = arith.addf %11, %12 : vector<8x128xf32>
    %c0_5 = arith.constant 0 : index
    %c0_6 = arith.constant 0 : index
    %14 = vector.load %arg5[%c0_5, %c0_6] : memref<8x128xf32, #tpu.memory_space<vmem>>, vector<8x128xf32>
    tpu.vector_store %arg5[%c0_5, %c0_6], %13 {strides = array<i32>} : memref<8x128xf32, #tpu.memory_space<vmem>>, vector<8x128xf32>,
    %c1_i32 = arith.constant 1 : i32
    %c0_i32_7 = arith.constant 0 : i32
    %15 = arith.cmpi eq, %arg1, %c0_i32_7 : i32
    %16 = arith.extui %15 : i1 to i32
    %c0_i32_8 = arith.constant 0 : i32
    %17 = arith.cmpi ne, %16, %c0_i32_8 : i32
    scf.if %17 {
      %c0_9 = arith.constant 0 : index
      %c0_10 = arith.constant 0 : index
      %18 = vector.load %arg5[%c0_9, %c0_10] : memref<8x128xf32, #tpu.memory_space<vmem>>, vector<8x128xf32>
      %19 = vector.shape_cast %18 : vector<8x128xf32> to vector<1x8x128xf32>
      %cst_11 = arith.constant dense<0.000000e+00> : vector<1xf32>
      %20 = vector.multi_reduction <add>, %19, %cst_11 [1, 2] : vector<1x8x128xf32> to vector<1xf32>
      %21 = vector.shape_cast %20 : vector<1xf32> to vector<1x1x1xf32>
      %22 = vector.extract %21[0, 0, 0] : f32 from vector<1x1x1xf32>
      %cst_12 = arith.constant 1.280000e+02 : f32
      %23 = arith.divf %22, %cst_12 : f32
      %c0_13 = arith.constant 0 : index
      %c0_14 = arith.constant 0 : index
      %24 = vector.load %arg2[%c0_13, %c0_14] : memref<2x8xf32, #tpu.memory_space<vmem>>, vector<1x8xf32>
      %cst_15 = arith.constant 0.000000e+00 : f32
      %cst_16 = arith.constant 1.000000e+00 : f32
      %25 = vector.broadcast %cst_15 : f32 to vector<1x8xf32>
      %26 = arith.maximumf %25, %24 : vector<1x8xf32>
      %27 = vector.broadcast %cst_16 : f32 to vector<1x8xf32>
      %28 = arith.minimumf %27, %26 : vector<1x8xf32>
      %c1 = arith.constant 1 : index
      %c0_17 = arith.constant 0 : index
      %29 = vector.load %arg2[%c1, %c0_17] : memref<2x8xf32, #tpu.memory_space<vmem>>, vector<1x8xf32>
      %30 = arith.subf %28, %29 : vector<1x8xf32>
      %31 = arith.mulf %30, %30 : vector<1x8xf32>
      %32 = vector.shape_cast %31 : vector<1x8xf32> to vector<1x1x8xf32>
      %cst_18 = arith.constant dense<0.000000e+00> : vector<1xf32>
      %33 = vector.multi_reduction <add>, %32, %cst_18 [1, 2] : vector<1x1x8xf32> to vector<1xf32>
      %34 = vector.shape_cast %33 : vector<1xf32> to vector<1x1x1xf32>
      %35 = vector.extract %34[0, 0, 0] : f32 from vector<1x1x1xf32>
      %c0_i32_19 = arith.constant 0 : i32
      %36 = arith.cmpi eq, %arg0, %c0_i32_19 : i32
      %cst_20 = arith.constant 0.000000e+00 : f32
      %37 = arith.select %36, %35, %cst_20 : f32
      %38 = arith.addf %23, %37 : f32
      %39 = tpu.iota {dimensions = array<i32: 2>} : vector<1x1x128xi32>
      %c0_i32_21 = arith.constant 0 : i32
      %40 = vector.broadcast %c0_i32_21 : i32 to vector<1x1x128xi32>
      %41 = arith.cmpi eq, %39, %40 : vector<1x1x128xi32>
      %cst_22 = arith.constant 0.000000e+00 : f32
      %42 = vector.broadcast %38 : f32 to vector<1x1x128xf32>
      %43 = vector.broadcast %cst_22 : f32 to vector<1x1x128xf32>
      %44 = arith.select %41, %42, %43 : vector<1x1x128xi1>, vector<1x1x128xf32>
      %c0_23 = arith.constant 0 : index
      %c0_24 = arith.constant 0 : index
      %c0_25 = arith.constant 0 : index
      %45 = vector.load %arg4[%c0_23, %c0_24, %c0_25] : memref<1x1x128xf32, #tpu.memory_space<vmem>>, vector<1x1x128xf32>
      tpu.vector_store %arg4[%c0_23, %c0_24, %c0_25], %44 {strides = array<i32>} : memref<1x1x128xf32, #tpu.memory_space<vmem>>, vector<1x1x128xf32>,
    } else {
    }
    return
  }
  func.func @transform_0(%arg0: i32, %arg1: i32) -> (i32, i32) {
    %c0_i32 = arith.constant 0 : i32
    %c0_i32_0 = arith.constant 0 : i32
    %c0_i32_1 = arith.constant 0 : i32
    return %c0_i32, %c0_i32_0 : i32, i32
  }
  func.func @transform_1(%arg0: i32, %arg1: i32) -> (i32, i32) {
    %c0_i32 = arith.constant 0 : i32
    return %arg0, %arg1 : i32, i32
  }
  func.func @transform_2(%arg0: i32, %arg1: i32) -> (i32, i32, i32) {
    %c0_i32 = arith.constant 0 : i32
    %c0_i32_0 = arith.constant 0 : i32
    %c0_i32_1 = arith.constant 0 : i32
    return %arg0, %c0_i32, %c0_i32_0 : i32, i32, i32
  }
}

</mosaic_0001>

<llo_original>
// kernel: tpu_custom_call.1
$region0: #{tpu_custom_call.1}
  #allocation0 [shape = 'u32[]', space=smem, size = 0x4, offset = 0x4, fixed_abs, tag = 'smem constant byte address 0x4 - core index']
  #allocation1 [shape = 'u32[72,128]{1,0:T(1,128)}', space=vmem, size = 0x9000, scoped, tag = 'internal scratch']
  #allocation2 [shape = 'f32[8,128]{1,0:T(8,128)}', space=vmem, size = 0x1000, scoped, tag = 'scratch operand']
  %s0 = inlined_call_operand.hbm [shape: f32[2,8], index: 0, kind: input, shape index: {}]
  %s1 = inlined_call_operand.hbm [shape: f32[8,128], index: 1, kind: input, shape index: {}]
  %s2 = inlined_call_operand.hbm [shape: f32[1,1,128], index: 2, kind: output, shape index: {}]
  %s3 = sld [smem:[#allocation0]]
  $region34: #{tpu_custom_call.1} parent=0
    _
  %s5 = ssub.s32 1, %s3
  %s6 = scalar_select 0, %s5, %s3
  $region1: #{tpu_custom_call.1} parent=0
    #allocation3 [shape = 'u8[1024]{0}', space=vmem, size = 0x400, scoped, tag = 'input window, operand 0, single buffered']
    #allocation4 [shape = 's32[1]{0}', space=sflag, size = 0x4, scoped, tag = 'scoped memory for tpu_custom_call.1']
    #allocation5 [shape = 's32[1]{0}', space=sflag, size = 0x4, scoped, tag = 'scoped memory for tpu_custom_call.1']
    #allocation6 [shape = 'u8[4096]{0}', space=vmem, size = 0x1000, scoped, tag = 'input window, operand 1, single buffered']
    #allocation7 [shape = 's32[1]{0}', space=sflag, size = 0x4, scoped, tag = 'scoped memory for tpu_custom_call.1']
    #allocation8 [shape = 'u8[512]{0}', space=vmem, size = 0x400, scoped, tag = 'output window, operand 0, single buffered']
    %7 = vsyncpa [#allocation4], 0
    %8 = vsyncpa [#allocation7], 0
    %9 = vsyncpa [#allocation5], 0
    // Predicated region
    $region2: #{tpu_custom_call.1} parent=1 // pred_check
      _
    $region3: #{tpu_custom_call.1} parent=1 // pred_check_branch
      %11 = sbr.rel (0) target = $region5
    $region4: #{tpu_custom_call.1} parent=1 // pred_region
      %13 = vsyncadd [#allocation4], 0
      %s15 = sshll.u32 %s0, 4
      %s16 = int_to_ptr.hbm [resolvable:$true] %s15
      %s17 = sshll.u32 [#allocation3], 4
      %s18 = int_to_ptr.vmem [resolvable:$true] %s17
      %20 = dma.hbm_to_vmem [thread:$0]  %s16, 32, %s18, [#allocation4]
    $region5: #{tpu_custom_call.1} parent=1 // pred_fallthru
      _
    // Predicated region
    $region6: #{tpu_custom_call.1} parent=1 // pred_check
      _
    $region7: #{tpu_custom_call.1} parent=1 // pred_check_branch
      %22 = sbr.rel (0) target = $region9
    $region8: #{tpu_custom_call.1} parent=1 // pred_region
      %24 = vsyncadd [#allocation7], 0
      %s26 = sshll.u32 %s1, 4
      %s27 = int_to_ptr.hbm [resolvable:$true] %s26
      %s28 = sshll.u32 [#allocation6], 4
      %s29 = int_to_ptr.vmem [resolvable:$true] %s28
      %31 = dma.hbm_to_vmem [thread:$0]  %s27, 128, %s29, [#allocation7]
    $region9: #{tpu_custom_call.1} parent=1 // pred_fallthru
      _
    // Predicated region
    $region10: #{tpu_custom_call.1} parent=1 // pred_check
      _
    $region11: #{tpu_custom_call.1} parent=1 // pred_check_branch
      %33 = sbr.rel (0) target = $region13
    $region12: #{tpu_custom_call.1} parent=1 // pred_region
      %35 = dma.done [#allocation4], 32
    $region13: #{tpu_custom_call.1} parent=1 // pred_fallthru
      _
    // Predicated region
    $region14: #{tpu_custom_call.1} parent=1 // pred_check
      _
    $region15: #{tpu_custom_call.1} parent=1 // pred_check_branch
      %37 = sbr.rel (0) target = $region17
    $region16: #{tpu_custom_call.1} parent=1 // pred_region
      %39 = dma.done [#allocation7], 128
    $region17: #{tpu_custom_call.1} parent=1 // pred_fallthru
      _
    %p40 = scmp.eq.s32.totalorder 0, 0
    // Predicated region
    $region18: #{tpu_custom_call.1} parent=1 // pred_check
      %p41 = pneg %p40
    $region19: #{tpu_custom_call.1} parent=1 // pred_check_branch
      %43 = sbr.rel (%p41) target = $region21
    $region20: #{tpu_custom_call.1} parent=1 // pred_region
      %44 = vst [vmem:[#allocation2] sm:$0xff] 0.0
    $region21: #{tpu_custom_call.1} parent=1 // pred_fallthru
      _
    %v45 = vld [vmem:[#allocation6] sm:$0xff]
    %v46 = vmax.f32 %v45, 0.0
    %v47 = vmin.f32 %v46, 1.0
    %v48 = vld [vmem:[#allocation2] sm:$0xff]
    %v49 = vmul.f32 %v47, %v47
    %v50 = vadd.f32 %v48, %v49
    %51 = vst [vmem:[#allocation2] sm:$0xff] %v50
    // Predicated region
    $region22: #{tpu_custom_call.1} parent=1 // pred_check
      %p52 = pneg %p40
    $region23: #{tpu_custom_call.1} parent=1 // pred_check_branch
      %54 = sbr.rel (%p52) target = $region25
    $region24: #{tpu_custom_call.1} parent=1 // pred_region
      %v55 = vld [vmem:[#allocation2] sm:$0xff]
      %56 = vadd.xlane.f32.xlu0 %v55
      %v57 = vpop.xlane.xlu0 %56
      %v58 = vrot.slane %v57, 4
      %v59 = vadd.f32 %v57, %v58
      %v60 = vrot.slane %v59, 2
      %v61 = vadd.f32 %v59, %v60
      %v62 = vrot.slane %v61, 1
      %v63 = vadd.f32 %v61, %v62
      %s64 = vtos %v63
      %v65 = vrcp.pop 128.0
      %v66 = vmul.f32 128.0, %v65
      %v67 = vsub.f32 1.0, %v66
      %v68 = vmul.f32 %v65, %v67
      %v69 = vadd.f32 %v65, %v68
      %vm70 = vweird.f32 %v65
      %v71 = vsel %vm70, %v65, %v69
      %s72 = vtos %v71
      %s73 = smul.f32 %s64, %s72
      %v74 = vld [vmem:[#allocation3] sm:$0x1]
      %v75 = vmax.f32 %v74, 0.0
      %v76 = vmin.f32 %v75, 1.0
      %v77 = vld [vmem:[#allocation3 + $0x1] sm:$0x1]
      %v78 = vsub.f32 %v76, %v77
      %v79 = vmul.f32 %v78, %v78
      %vm80 = vcmask 57344
      %v81 = vsel %vm80, %v79, 0.0
      %82 = vadd.xlane.f32.xlu0 %v81
      %v83 = vpop.xlane.xlu0 %82
      %v84 = vrot.slane %v83, 4
      %v85 = vadd.f32 %v83, %v84
      %v86 = vrot.slane %v85, 2
      %v87 = vadd.f32 %v85, %v86
      %v88 = vrot.slane %v87, 1
      %v89 = vadd.f32 %v87, %v88
      %s90 = vtos %v89
      %p91 = scmp.eq.s32.totalorder 0, 0
      %s92 = scalar_select %p91, %s90, 0.0
      %s93 = sadd.f32 %s73, %s92
      %v94 = vlaneseq
      %v95 = vand.u32 %v94, 127
      %vm96 = vcmp.eq.s32.totalorder %v95, 0
      %v97 = vstv %s93
      %v98 = vsel %vm96, %v97, 0.0
      %99 = vst [vmem:[#allocation8] sm:$0x1] %v98
    $region25: #{tpu_custom_call.1} parent=1 // pred_fallthru
      _
    // Predicated region
    $region26: #{tpu_custom_call.1} parent=1 // pred_check
      _
    $region27: #{tpu_custom_call.1} parent=1 // pred_check_branch
      %101 = sbr.rel (0) target = $region29
    $region28: #{tpu_custom_call.1} parent=1 // pred_region
      %103 = vsyncadd [#allocation5], 0
      %s105 = sshll.u32 [#allocation8], 4
      %s106 = int_to_ptr.vmem [resolvable:$true] %s105
      %s107 = sshll.u32 %s2, 4
      %s108 = int_to_ptr.hbm [resolvable:$true] %s107
      %110 = dma.vmem_to_hbm [thread:$0]  %s106, 16, %s108, [#allocation5]
    $region29: #{tpu_custom_call.1} parent=1 // pred_fallthru
      _
    // Predicated region
    $region30: #{tpu_custom_call.1} parent=1 // pred_check
      _
    $region31: #{tpu_custom_call.1} parent=1 // pred_check_branch
      %112 = sbr.rel (0) target = $region33
    $region32: #{tpu_custom_call.1} parent=1 // pred_region
      %114 = dma.done [#allocation5], 16
    $region33: #{tpu_custom_call.1} parent=1 // pred_fallthru
      _
    %115 = vsyncpa [#allocation4], 1
    %116 = vsyncpa [#allocation7], 1
    %117 = vsyncpa [#allocation5], 1

</llo_original>
